<compile_context>
chip_gen: v7x
topology: tpu7x:2x2x1
jax: 0.10.0
libtpu: 0.0.40
codegen_flags: <defaults>
</compile_context>

<pallas_src>
import functools

import jax
import jax.numpy as jnp
from jax.experimental import pallas as pl
from jax.experimental.pallas import tpu as pltpu

_LN_EPS = 1e-5


def _tpu_vmem_capacity():
    try:
        return int(pltpu.get_tpu_info().vmem_capacity_bytes)
    except Exception:
        return 0   # unknown -> choose the conservative (v7x-safe) configuration


_VMEM_CAP = _tpu_vmem_capacity()
if _VMEM_CAP >= 100 * 1024 * 1024:      # v5e / v6e: 128 MiB physical VMEM per core
    _VMEM_LIMIT = 96 * 1024 * 1024
    _TM, _TN, _TK = 512, 1024, 1024
else:                                   # v7x (64 MiB physical) or unknown
    _VMEM_LIMIT = 48 * 1024 * 1024
    _TM, _TN, _TK = 256, 512, 512


def _pick_tile(dim, target, base):
    """Largest tile <= target that is a multiple of `base` and divides `dim` exactly.
    Used only for the contraction (K) axis where partial blocks are unsafe. Falls back
    to the full dimension (block == array dim is always legal)."""
    if dim <= target:
        return dim
    start = target - (target % base)
    for t in range(start, base - 1, -base):
        if dim % t == 0:
            return t
    return dim


# ----------------------------- Pallas kernels ------------------------------

def _linear_kernel(*refs, n_k, fuse_ln, has_bias, has_residual, quick_gelu, use_acc):
    """Tiled matmul with optional fused LayerNorm (pre), bias, QuickGELU, residual.

    fuse_ln implies tk == K (n_k == 1); the normalized row tile is cached in a bf16 VMEM
    scratch at j == 0 and reused for the remaining N tiles of the same M tile."""
    it = iter(refs)
    x_ref = next(it)
    w_ref = next(it)
    ln_g_ref = next(it) if fuse_ln else None
    ln_b_ref = next(it) if fuse_ln else None
    b_ref = next(it) if has_bias else None
    res_ref = next(it) if has_residual else None
    o_ref = next(it)
    acc_ref = next(it) if use_acc else None
    xn_ref = next(it) if fuse_ln else None

    k = pl.program_id(2)

    if fuse_ln:
        @pl.when(pl.program_id(1) == 0)
        def _ln():
            xf = x_ref[...].astype(jnp.float32)
            mu = jnp.mean(xf, axis=-1, keepdims=True)
            var = jnp.mean(jnp.square(xf - mu), axis=-1, keepdims=True)
            xn = (xf - mu) * jax.lax.rsqrt(var + _LN_EPS)
            xn = xn * ln_g_ref[...] + ln_b_ref[...]
            xn_ref[...] = xn.astype(jnp.bfloat16)
        x = xn_ref[...]
    else:
        x = x_ref[...].astype(jnp.bfloat16)

    w = w_ref[...].astype(jnp.bfloat16)
    partial = jnp.dot(x, w, preferred_element_type=jnp.float32)

    def _epilogue(y):
        if has_bias:
            y = y + b_ref[...]
        if quick_gelu:
            y = y * jax.nn.sigmoid(1.702 * y)          # CLIP QuickGELU
        if has_residual:
            y = y + res_ref[...].astype(jnp.float32)
        o_ref[...] = y.astype(o_ref.dtype)

    if use_acc:
        @pl.when(k == 0)
        def _init():
            acc_ref[...] = jnp.zeros_like(acc_ref)

        acc_ref[...] += partial

        @pl.when(k == n_k - 1)
        def _finalize():
            _epilogue(acc_ref[...])
    else:
        _epilogue(partial)


def _layernorm_kernel(x_ref, g_ref, b_ref, o_ref):
    x = x_ref[...].astype(jnp.float32)
    mu = jnp.mean(x, axis=-1, keepdims=True)
    var = jnp.mean(jnp.square(x - mu), axis=-1, keepdims=True)
    y = (x - mu) * jax.lax.rsqrt(var + _LN_EPS) * g_ref[...] + b_ref[...]
    o_ref[...] = y.astype(o_ref.dtype)


def _attention_kernel(qkv_ref, wo_ref, bo_ref, res_ref, o_ref, ctx_ref,
                      *, heads, dh, scale):
    """Per-batch-element multi-head attention. Heads are static column slices of the
    (1, T, 3D) QKV tile; each head's context goes into a (T, D) bf16 VMEM scratch, then
    a single (T,D)@(D,D) out-projection (+bias +residual) writes a lane-dense (1,T,D)
    output."""
    D = heads * dh
    for h in range(heads):                               # static unrolled head loop
        q = qkv_ref[0, :, h * dh:(h + 1) * dh] * scale   # fold scale into q  (T, dh)
        k = qkv_ref[0, :, D + h * dh:D + (h + 1) * dh]
        v = qkv_ref[0, :, 2 * D + h * dh:2 * D + (h + 1) * dh]
        s = jax.lax.dot_general(
            q.astype(jnp.bfloat16), k.astype(jnp.bfloat16),
            (((1,), (1,)), ((), ())), preferred_element_type=jnp.float32)   # (T, T)
        s = s - jnp.max(s, axis=-1, keepdims=True)
        p = jnp.exp(s)
        p = p * pl.reciprocal(jnp.sum(p, axis=-1, keepdims=True), approx=True)
        ctx_ref[:, h * dh:(h + 1) * dh] = jnp.dot(
            p.astype(jnp.bfloat16), v.astype(jnp.bfloat16),
            preferred_element_type=jnp.float32).astype(jnp.bfloat16)         # (T, dh)

    out = jnp.dot(ctx_ref[...], wo_ref[...].astype(jnp.bfloat16),
                  preferred_element_type=jnp.float32)                        # (T, D)
    out = out + bo_ref[...] + res_ref[0].astype(jnp.float32)
    o_ref[0] = out.astype(o_ref.dtype)


# ----------------------------- Pallas wrappers ------------------------------

def pallas_linear(x, w, b=None, *, ln=None, residual=None, quick_gelu=False,
                  out_dtype=jnp.bfloat16):
    """y = [LN](x) @ w (+ b) [QuickGELU] (+ residual); bf16 MXU, f32 accumulation.

    M and N use pl.cdiv grids (partial edge blocks are legal: pad rows/cols only affect
    discarded output elements). K must tile exactly (or use the full row when LN is
    fused, since LN needs the whole feature dimension)."""
    M, K = x.shape
    N = w.shape[1]
    fuse_ln = ln is not None
    has_bias = b is not None
    has_res = residual is not None

    tm = min(M, _TM)
    tn = min(N, _TN)
    tk = K if fuse_ln else _pick_tile(K, _TK, 128)
    n_k = K // tk
    use_acc = n_k > 1

    # Cheap host-side guard: keep the (double-buffered) working set well under the limit.
    est = 2 * (tm * tk * x.dtype.itemsize + tk * tn * w.dtype.itemsize
               + tm * tn * jnp.dtype(out_dtype).itemsize)
    if use_acc:
        est += tm * tn * 4
    if fuse_ln:
        est += tm * K * 2
    assert est < _VMEM_LIMIT, (est, _VMEM_LIMIT)

    kern = functools.partial(_linear_kernel, n_k=n_k, fuse_ln=fuse_ln,
                             has_bias=has_bias, has_residual=has_res,
                             quick_gelu=quick_gelu, use_acc=use_acc)

    # TODO(synk): on v5e, pipeline_mode=pl.Buffered(3) on the weight spec can help if
    # the K-step weight DMA is exposed; left at the default double-buffering here.
    in_specs = [pl.BlockSpec((tm, tk), lambda i, j, k: (i, k)),
                pl.BlockSpec((tk, tn), lambda i, j, k: (k, j))]
    args = [x, w]
    if fuse_ln:
        g, bb = ln
        in_specs += [pl.BlockSpec((1, K), lambda i, j, k: (0, 0)),
                     pl.BlockSpec((1, K), lambda i, j, k: (0, 0))]
        args += [g.reshape(1, K).astype(jnp.float32),
                 bb.reshape(1, K).astype(jnp.float32)]
    if has_bias:
        in_specs.append(pl.BlockSpec((1, tn), lambda i, j, k: (0, j)))
        args.append(b.reshape(1, N).astype(jnp.float32))
    if has_res:
        in_specs.append(pl.BlockSpec((tm, tn), lambda i, j, k: (i, j)))
        args.append(residual)

    scratch = []
    if use_acc:
        scratch.append(pltpu.VMEM((tm, tn), jnp.float32))
    if fuse_ln:
        scratch.append(pltpu.VMEM((tm, K), jnp.bfloat16))

    # With the LN cache scratch, the N axis must stay on one core per M tile, so it is
    # marked "arbitrary" (megacore then splits the M axis only).
    semantics = ("parallel", "arbitrary" if fuse_ln else "parallel", "arbitrary")

    return pl.pallas_call(
        kern,
        out_shape=jax.ShapeDtypeStruct((M, N), out_dtype),
        grid=(pl.cdiv(M, tm), pl.cdiv(N, tn), n_k),
        in_specs=in_specs,
        out_specs=pl.BlockSpec((tm, tn), lambda i, j, k: (i, j)),
        scratch_shapes=scratch,
        compiler_params=pltpu.CompilerParams(
            dimension_semantics=semantics,
            vmem_limit_bytes=_VMEM_LIMIT),
    )(*args)


def pallas_layernorm(x, g, b, *, tm=1024):
    M, D = x.shape
    tm = min(M, tm)
    return pl.pallas_call(
        _layernorm_kernel,
        out_shape=jax.ShapeDtypeStruct((M, D), jnp.bfloat16),
        grid=(pl.cdiv(M, tm),),
        in_specs=[pl.BlockSpec((tm, D), lambda i: (i, 0)),
                  pl.BlockSpec((1, D), lambda i: (0, 0)),
                  pl.BlockSpec((1, D), lambda i: (0, 0))],
        out_specs=pl.BlockSpec((tm, D), lambda i: (i, 0)),
        compiler_params=pltpu.CompilerParams(
            dimension_semantics=("parallel",),
            vmem_limit_bytes=_VMEM_LIMIT),
    )(x, g.reshape(1, D).astype(jnp.float32), b.reshape(1, D).astype(jnp.float32))


def pallas_attention(qkv, wo, bo, residual, *, heads):
    """qkv: (B, T, 3D) bf16; wo: (D, D) bf16; bo: (D,); residual: (B, T, D) bf16."""
    B, T, threeD = qkv.shape
    D = threeD // 3
    dh = D // heads
    # TODO(synk): for v7x single-batch inference a second "parallel" grid axis over
    # 128-row q tiles would use both TensorCores; kept (B,) here for simplicity.
    kern = functools.partial(_attention_kernel, heads=heads, dh=dh,
                             scale=1.0 / (dh ** 0.5))
    return pl.pallas_call(
        kern,
        out_shape=jax.ShapeDtypeStruct((B, T, D), jnp.bfloat16),
        grid=(B,),
        in_specs=[pl.BlockSpec((1, T, threeD), lambda bi: (bi, 0, 0)),
                  pl.BlockSpec((D, D), lambda bi: (0, 0)),
                  pl.BlockSpec((1, D), lambda bi: (0, 0)),
                  pl.BlockSpec((1, T, D), lambda bi: (bi, 0, 0))],
        out_specs=pl.BlockSpec((1, T, D), lambda bi: (bi, 0, 0)),
        scratch_shapes=[pltpu.VMEM((T, D), jnp.bfloat16)],
        compiler_params=pltpu.CompilerParams(
            dimension_semantics=("parallel",),
            vmem_limit_bytes=_VMEM_LIMIT),
    )(qkv, wo, bo.reshape(1, D).astype(jnp.float32), residual)


# ----------------------------- model (glue) ------------------------------

def residual_block(x, lp, *, heads):
    B, T, D = x.shape
    xf = x.reshape(B * T, D)

    # attention branch: ln_1 fused into the QKV projection; QKV stays (B, T, 3D) and
    # heads are split with static column slices inside the attention kernel (no XLA
    # transpose). Attention + out-proj + bias + residual run in one kernel.
    qkv = pallas_linear(xf, lp["attn_in_w"], lp["attn_in_b"],
                        ln=(lp["ln1_g"], lp["ln1_b"])).reshape(B, T, 3 * D)
    x = pallas_attention(qkv, lp["attn_out_w"], lp["attn_out_b"], x, heads=heads)

    # MLP branch: ln_2 fused into fc(+QuickGELU); residual fused into proj.
    xf = x.reshape(B * T, D)
    h = pallas_linear(xf, lp["mlp_fc_w"], lp["mlp_fc_b"],
                      ln=(lp["ln2_g"], lp["ln2_b"]), quick_gelu=True)
    x = pallas_linear(h, lp["mlp_proj_w"], lp["mlp_proj_b"],
                      residual=xf).reshape(B, T, D)
    return x


def encode_image(images, p, *, heads, patch):
    B, C, H, W = images.shape
    gh, gw = H // patch, W // patch
    width = p["class_embedding"].shape[0]

    # Conv2d(C, width, kernel=patch, stride=patch, bias=False) as a patch matmul.
    # TODO(synk): the 6-D transpose is one extra XLA pass over the f32 image; it could
    # be folded into the patch matmul's index_map (NHWC pre-arrangement) for a small win.
    patches = images.reshape(B, C, gh, patch, gw, patch)
    patches = patches.transpose(0, 2, 4, 1, 3, 5).reshape(B * gh * gw, C * patch * patch)
    tok = pallas_linear(patches, p["patch_w"]).reshape(B, gh * gw, width)   # bf16

    # prepend class token, add positional embedding (bf16 residual stream), ln_pre
    cls = jnp.broadcast_to(p["class_embedding"].astype(jnp.bfloat16)[None, None, :],
                           (B, 1, width))
    x = jnp.concatenate([cls, tok], axis=1) + p["pos_embedding"].astype(jnp.bfloat16)[None]
    T = x.shape[1]
    x = pallas_layernorm(x.reshape(B * T, width),
                         p["ln_pre_g"], p["ln_pre_b"]).reshape(B, T, width)

    for lp in p["blocks"]:
        x = residual_block(x, lp, heads=heads)

    # ln_post on the class token fused into the visual projection (no bias in CLIP).
    pooled = x[:, 0, :]                                                     # (B, width)
    return pallas_linear(pooled, p["proj"], ln=(p["ln_post_g"], p["ln_post_b"]),
                         out_dtype=jnp.float32)


def init_params(key, *, in_ch, patch, width, grid_size, layers, heads, embed_dim):
    # TODO(synk): the real module loads pretrained CLIP weights + torchvision
    # preprocessing; here parameters are deterministic synthetic initializations.
    del heads
    T = grid_size * grid_size + 1
    mlp = 4 * width
    keys = iter(jax.random.split(key, 4 + layers * 4))

    def nrm(shape, std, dtype=jnp.bfloat16):
        return (std * jax.random.normal(next(keys), shape)).astype(dtype)

    params = {
        # matmul weights stored bf16 (CLIP itself runs fp16); LN params / biases f32
        "patch_w": nrm((in_ch * patch * patch, width), width ** -0.5),
        "class_embedding": nrm((width,), width ** -0.5, jnp.float32),
        "pos_embedding": nrm((T, width), width ** -0.5, jnp.float32),
        "ln_pre_g": jnp.ones((width,), jnp.float32),
        "ln_pre_b": jnp.zeros((width,), jnp.float32),
        "ln_post_g": jnp.ones((width,), jnp.float32),
        "ln_post_b": jnp.zeros((width,), jnp.float32),
        "proj": nrm((width, embed_dim), width ** -0.5),
        "blocks": [],
    }
    for _ in range(layers):
        params["blocks"].append({
            "ln1_g": jnp.ones((width,), jnp.float32),
            "ln1_b": jnp.zeros((width,), jnp.float32),
            "attn_in_w": nrm((width, 3 * width), width ** -0.5),
            "attn_in_b": jnp.zeros((3 * width,), jnp.float32),
            "attn_out_w": nrm((width, width), width ** -0.5),
            "attn_out_b": jnp.zeros((width,), jnp.float32),
            "ln2_g": jnp.ones((width,), jnp.float32),
            "ln2_b": jnp.zeros((width,), jnp.float32),
            "mlp_fc_w": nrm((width, mlp), width ** -0.5),
            "mlp_fc_b": jnp.zeros((mlp,), jnp.float32),
            "mlp_proj_w": nrm((mlp, width), (2 * width) ** -0.5),
            "mlp_proj_b": jnp.zeros((width,), jnp.float32),
        })
    return params


if __name__ == "__main__":
    key = jax.random.PRNGKey(0)
    k_img, k_par = jax.random.split(key)

    B, C, H, W = 2, 3, 16, 16          # small images
    PATCH, WIDTH, HEADS, LAYERS, EMBED = 4, 32, 4, 2, 16
    GRID = H // PATCH                   # 4 -> 17 tokens incl. class token

    images = jax.random.normal(k_img, (B, C, H, W), dtype=jnp.float32)
    params = init_params(k_par, in_ch=C, patch=PATCH, width=WIDTH,
                         grid_size=GRID, layers=LAYERS, heads=HEADS,
                         embed_dim=EMBED)

    out = encode_image(images, params, heads=HEADS, patch=PATCH)
    out = jax.block_until_ready(out)
    assert out.shape == (B, EMBED), out.shape
    assert bool(jnp.all(jnp.isfinite(out)))
    print("KERNEL_OK")
</pallas_src>

<mosaic_0001>
module attributes {stable_mosaic.version = 11 : i64} {
  func.func @_linear_kernel(%arg0: i32, %arg1: i32, %arg2: i32, %arg3: memref<32x48xf32, #tpu.memory_space<vmem>>, %arg4: memref<48x32xbf16, #tpu.memory_space<vmem>>, %arg5: memref<32x32xbf16, #tpu.memory_space<vmem>>) attributes {dimension_semantics = [#tpu.dimension_semantics<parallel>, #tpu.dimension_semantics<parallel>, #tpu.dimension_semantics<arbitrary>], iteration_bounds = array<i64: 1, 1, 1>, scalar_prefetch = 0 : i64, scratch_operands = 0 : i64, tpu.core_type = #tpu.core_type<tc>, window_params = [{transform_indices = @transform_0, window_bounds = array<i64: 32, 48>}, {transform_indices = @transform_1, window_bounds = array<i64: 48, 32>}, {transform_indices = @transform_2, window_bounds = array<i64: 32, 32>}]} {
    %c0 = arith.constant 0 : index
    %c0_0 = arith.constant 0 : index
    %0 = vector.load %arg3[%c0, %c0_0] : memref<32x48xf32, #tpu.memory_space<vmem>>, vector<32x48xf32>
    %1 = arith.truncf %0 : vector<32x48xf32> to vector<32x48xbf16>
    %c0_1 = arith.constant 0 : index
    %c0_2 = arith.constant 0 : index
    %2 = vector.load %arg4[%c0_1, %c0_2] : memref<48x32xbf16, #tpu.memory_space<vmem>>, vector<48x32xbf16>
    %cst = arith.constant dense<0.000000e+00> : vector<32x32xf32>
    %3 = tpu.matmul %1, %2, %cst {dimension_numbers = #tpu.dot_dimension_numbers<[1], [0], [0], [1], [0, 0, 1, 1], [], []>} : vector<32x48xbf16>, vector<48x32xbf16>, vector<32x32xf32> -> vector<32x32xf32>
    %4 = arith.truncf %3 : vector<32x32xf32> to vector<32x32xbf16>
    %c0_3 = arith.constant 0 : index
    %c0_4 = arith.constant 0 : index
    %5 = vector.load %arg5[%c0_3, %c0_4] : memref<32x32xbf16, #tpu.memory_space<vmem>>, vector<32x32xbf16>
    tpu.vector_store %arg5[%c0_3, %c0_4], %4 {strides = array<i32>} : memref<32x32xbf16, #tpu.memory_space<vmem>>, vector<32x32xbf16>,
    return
  }
  func.func @transform_0(%arg0: i32, %arg1: i32, %arg2: i32) -> (i32, i32) {
    %c0_i32 = arith.constant 0 : i32
    return %arg0, %arg2 : i32, i32
  }
  func.func @transform_1(%arg0: i32, %arg1: i32, %arg2: i32) -> (i32, i32) {
    %c0_i32 = arith.constant 0 : i32
    return %arg2, %arg1 : i32, i32
  }
  func.func @transform_2(%arg0: i32, %arg1: i32, %arg2: i32) -> (i32, i32) {
    %c0_i32 = arith.constant 0 : i32
    return %arg0, %arg1 : i32, i32
  }
}

</mosaic_0001>

<llo_original>
// kernel: tpu_custom_call.1
$region0: #{tpu_custom_call.1}
  #allocation0 [shape = 'u32[]', space=smem, size = 0x4, offset = 0x4, fixed_abs, tag = 'smem constant byte address 0x4 - core index']
  #allocation1 [shape = 'u32[144,128]{1,0:T(1,128)}', space=vmem, size = 0x12000, scoped, tag = 'internal scratch']
  %s0 = inlined_call_operand.vmem [shape: f32[32,48], index: 0, kind: input, shape index: {}]
  %s1 = inlined_call_operand.vmem [shape: bf16[48,32], index: 1, kind: input, shape index: {}]
  %s2 = inlined_call_operand.hbm [shape: bf16[32,32], index: 2, kind: output, shape index: {}]
  %s3 = sld [smem:[#allocation0]]
  $region18: #{tpu_custom_call.1} parent=0
    _
  %s5 = ssub.s32 1, %s3
  %s6 = scalar_select 0, %s5, %s3
  $region1: #{tpu_custom_call.1} parent=0
    #allocation2 [shape = 'u8[8192]{0}', space=vmem, size = 0x2000, scoped, tag = 'output window, operand 0, single buffered']
    #allocation3 [shape = 's32[1]{0}', space=sflag, size = 0x4, scoped, tag = 'scoped memory for tpu_custom_call.1']
    %7 = vsyncpa [#allocation3], 0
    // Predicated region
    $region2: #{tpu_custom_call.1} parent=1 // pred_check
      _
    $region3: #{tpu_custom_call.1} parent=1 // pred_check_branch
      %9 = sbr.rel (0) target = $region5
    $region4: #{tpu_custom_call.1} parent=1 // pred_region
      _
    $region5: #{tpu_custom_call.1} parent=1 // pred_fallthru
      _
    // Predicated region
    $region6: #{tpu_custom_call.1} parent=1 // pred_check
      _
    $region7: #{tpu_custom_call.1} parent=1 // pred_check_branch
      %11 = sbr.rel (0) target = $region9
    $region8: #{tpu_custom_call.1} parent=1 // pred_region
      _
    $region9: #{tpu_custom_call.1} parent=1 // pred_fallthru
      _
    %v13 = vld [vmem:[%s0] sm:$0xff]
    %v14 = vld [vmem:[%s0 + $0x8] sm:$0xff]
    %v15 = vld [vmem:[%s0 + $0x10] sm:$0xff]
    %v16 = vld [vmem:[%s0 + $0x18] sm:$0xff]
    %v17 = vpack.c.bf16 %v14, %v13
    %v18 = vpack.c.bf16 %v16, %v15
    %v19 = vld [vmem:[%s1] sm:$0xf]
    %v20 = vld [vmem:[%s1 + $0x4] sm:$0xf]
    %v21 = vld [vmem:[%s1 + $0x8] sm:$0xf]
    %v22 = vld [vmem:[%s1 + $0xc] sm:$0xf]
    %v23 = vld [vmem:[%s1 + $0x10] sm:$0xf]
    %v24 = vld [vmem:[%s1 + $0x14] sm:$0xf]
    %v31 = vunpack.c.l.b16 %v19
    %v32 = vunpack.c.l.b16 %v20
    %v33 = vunpack.c.l.b16 %v21
    %v34 = vunpack.c.l.b16 %v22
    %v35 = vunpack.c.l.b16 %v23
    %v36 = vunpack.c.l.b16 %v24
    %v37 = vpack.c.b16 %v32, %v31
    %v38 = vpack.c.b16 %v34, %v33
    %v39 = vpack.c.b16 %v36, %v35
    %vm43 = vcmask 392192
    %v45 = vsel %vm43, %v17, 0
    %v48 = vsel %vm43, %v18, 0
    %50 = vmatprep.subr.bf16.mxu0 0
    %51 = vmatpush1.bf16.msra.mxu0 %v37
    %52 = vmatprep.subr.bf16.mxu0 0
    %53 = vmatpush1.bf16.msra.mxu0 %v38
    %54 = vmatprep.subr.bf16.mxu0 0
    %55 = vmatpush1.bf16.msra.mxu0 %v39
    %56 = vmatprep.subr.bf16.mxu0 0
    %57 = vmatpush1.bf16.msra.mxu0 0
    %58 = vmatprep.subr.bf16.mxu0 0
    %59 = vmatpush1.bf16.msra.mxu0 0
    %60 = vmatprep.subr.bf16.mxu0 0
    %61 = vmatpush1.bf16.msra.mxu0 0
    %62 = vmatprep.subr.bf16.mxu0 0
    %63 = vmatpush1.bf16.msra.mxu0 0
    %64 = vmatprep.subr.bf16.mxu0 0
    %65 = vmatpush1.bf16.msra.mxu0 0
    %66 = vmatprep.subr.bf16.mxu0 0
    %67 = vmatpush1.bf16.msra.mxu0 0
    %68 = vmatprep.subr.bf16.mxu0 0
    %69 = vmatpush1.bf16.msra.mxu0 0
    %70 = vmatprep.subr.bf16.mxu0 0
    %71 = vmatpush1.bf16.msra.mxu0 0
    %72 = vmatprep.subr.bf16.mxu0 0
    %73 = vmatpush1.bf16.msra.mxu0 0
    %74 = vmatprep.subr.bf16.mxu0 0
    %75 = vmatpush1.bf16.msra.mxu0 0
    %76 = vmatprep.subr.bf16.mxu0 0
    %77 = vmatpush1.bf16.msra.mxu0 0
    %78 = vmatprep.subr.bf16.mxu0 0
    %79 = vmatpush1.bf16.msra.mxu0 0
    %80 = vmatprep.subr.bf16.mxu0 0
    %81 = vmatpush1.bf16.msra.mxu0 0
    %82 = vmatprep.mubr.bf16.mxu0 0
    %83 = vmatmul.mubr.bf16.gmra.mrb[0].mxu0 %v45
    %v84 = vpop.f32.mrb[0].mxu0
    %v85 = vadd.f32 0.0, %v84
    %v86 = vpop.f32.mrb[0].mxu0
    %v87 = vpop.f32.mrb[0].mxu0
    %v88 = vadd.f32 0.0, %v87
    %v89 = vpop.f32.mrb[0].mxu0
    %90 = vmatprep.mubr.bf16.mxu0 0
    %91 = vmatmul.mubr.bf16.gmra.mrb[0].mxu0 %v48
    %v92 = vpop.f32.mrb[0].mxu0
    %v93 = vadd.f32 0.0, %v92
    %v94 = vpop.f32.mrb[0].mxu0
    %v95 = vpop.f32.mrb[0].mxu0
    %v96 = vadd.f32 0.0, %v95
    %v97 = vpop.f32.mrb[0].mxu0
    %98 = vdwg.mxu0
    %v99 = vpack.c.bf16 %v88, %v85
    %v100 = vpack.c.bf16 %v96, %v93
    %v103 = vunpack.c.l.b16 %v99
    %v104 = vunpack.c.h.b16 %v99
    %v105 = vunpack.c.l.b16 %v100
    %v106 = vunpack.c.h.b16 %v100
    %v107 = vpack.c.b16 %v103, %v103
    %v108 = vpack.c.b16 %v104, %v104
    %v109 = vpack.c.b16 %v105, %v105
    %v110 = vpack.c.b16 %v106, %v106
    %vm115 = vcmask 257024
    %116 = vst.msk [vmem:[#allocation2] sm:$0xf] %vm115, %v107
    %117 = vst.msk [vmem:[#allocation2 + $0x4] sm:$0xf] %vm115, %v108
    %118 = vst.msk [vmem:[#allocation2 + $0x8] sm:$0xf] %vm115, %v109
    %119 = vst.msk [vmem:[#allocation2 + $0xc] sm:$0xf] %vm115, %v110
    // Predicated region
    $region10: #{tpu_custom_call.1} parent=1 // pred_check
      _
    $region11: #{tpu_custom_call.1} parent=1 // pred_check_branch
      %121 = sbr.rel (0) target = $region13
    $region12: #{tpu_custom_call.1} parent=1 // pred_region
      %s123 = ssub.s32 256, 256
      %124 = vsyncadd [#allocation3], %s123
      %s125 = sshll.u32 [#allocation2], 4
      %s126 = int_to_ptr.vmem [resolvable:$true] %s125
      %131 = dma.vmem_to_hbm [thread:$0]  %s126, 256, %s2, [#allocation3], 64, 64, 4
    $region13: #{tpu_custom_call.1} parent=1 // pred_fallthru
      _
    // Predicated region
    $region14: #{tpu_custom_call.1} parent=1 // pred_check
      _
    $region15: #{tpu_custom_call.1} parent=1 // pred_check_branch
      %133 = sbr.rel (0) target = $region17
    $region16: #{tpu_custom_call.1} parent=1 // pred_region
      %134 = dma.done [#allocation3], 256
    $region17: #{tpu_custom_call.1} parent=1 // pred_fallthru
      _
    %135 = vsyncpa [#allocation3], 1

</llo_original>
